<compile_context>
chip_gen: v7x
topology: tpu7x:2x2x1
jax: 0.10.0
libtpu: 0.0.40
codegen_flags: <defaults>
</compile_context>

<pallas_src>
import jax
import jax.numpy as jnp
from jax import lax
from jax.experimental import pallas as pl
from jax.experimental.pallas import tpu as pltpu

# Contract the last dim of both operands (A @ B^T), same form as the official
# Pallas TPU flash-attention q@k^T matmul.
_TRANS_B_DIMS = (((1,), (1,)), ((), ()))


def _nernn_kernel(x_ref, w1_ref, b1_ref, w2_ref, b2_ref, w3t_ref, b3t_ref, o_ref):
    # x arrives as f32; cast to bf16 in-kernel (VPU cast, hidden under DMA/MXU).
    xb = x_ref[...].astype(jnp.bfloat16)                                # (TM, K)

    h1 = jnp.dot(xb, w1_ref[...], preferred_element_type=jnp.float32) + b1_ref[...]
    h1 = jnp.tanh(h1)                       # f32 tanh: correct on v5e (no bf16 EUP)
    # dropout (p=0.4) is identity at inference time.

    h2 = jnp.dot(h1.astype(jnp.bfloat16), w2_ref[...],
                 preferred_element_type=jnp.float32) + b2_ref[...]
    h2 = jnp.tanh(h2)

    # Final layer computed directly transposed:
    #   logits_t[c, t] = sum_h W3t[c, h] * h2[t, h]
    # Classes sit on sublanes (C_pad = 8), tokens on lanes (TM, multiple of 128),
    # so the output write-back is lane-dense instead of a 128-lane padded slab.
    logits_t = lax.dot_general(w3t_ref[...], h2.astype(jnp.bfloat16),
                               _TRANS_B_DIMS,
                               preferred_element_type=jnp.float32)       # (C_pad, TM)
    o_ref[...] = logits_t + b3t_ref[...]


def prepare_params(params):
    """One-time conversion to kernel layout (hoisted out of the per-call path):
    bf16 MXU weights, f32 biases, W3/b3 transposed with the class dim padded up
    to a multiple of 8 sublanes (zero pads -> padded class rows are exactly 0)."""
    w1, b1, w2, b2, w3, b3 = params
    h, c = w3.shape
    c_pad = max(8, ((c + 7) // 8) * 8)
    w3t = jnp.zeros((c_pad, h), w3.dtype).at[:c, :].set(w3.T)
    b3t = jnp.zeros((c_pad, 1), b3.dtype).at[:c, :].set(jnp.reshape(b3, (c, 1)))
    return (w1.astype(jnp.bfloat16), b1.astype(jnp.float32),
            w2.astype(jnp.bfloat16), b2.astype(jnp.float32),
            w3t.astype(jnp.bfloat16), b3t.astype(jnp.float32))


def nernn_forward(x, prepared, num_classes, *, tm=2048):
    """x: (num_tokens, vec_dim) float32.  Returns (logits, None)."""
    w1b, b1f, w2b, b2f, w3tb, b3tf = prepared
    m, k = x.shape
    h = w1b.shape[1]
    c_pad = w3tb.shape[0]

    # Row tiling: large tm amortizes the ~0.35us per-grid-step pipeline overhead;
    # all buffers stay tiny vs. the scoped-VMEM default even at tm=2048.
    # If m fits in one tile, use a single full-extent block (any m is then legal);
    # otherwise tm (multiple of 128) tiles with a partial boundary block — the
    # pipeline masks the out-of-bounds output lanes on write-back.
    tm_eff = m if m <= tm else tm
    grid = (pl.cdiv(m, tm_eff),)

    flops = 2 * m * (k * h + h * h + h * c_pad)
    transcendentals = 2 * m * h
    bytes_accessed = (4 * x.size
                      + 2 * (w1b.size + w2b.size + w3tb.size)
                      + 4 * (b1f.size + b2f.size + b3tf.size)
                      + 4 * c_pad * m)

    logits_t = pl.pallas_call(
        _nernn_kernel,
        out_shape=jax.ShapeDtypeStruct((c_pad, m), jnp.float32),
        grid=grid,
        in_specs=[
            pl.BlockSpec((tm_eff, k), lambda i: (i, 0)),     # x row tile (f32)
            pl.BlockSpec((k, h), lambda i: (0, 0)),          # W1 (resident)
            pl.BlockSpec((1, h), lambda i: (0, 0)),          # b1
            pl.BlockSpec((h, h), lambda i: (0, 0)),          # W2 (resident)
            pl.BlockSpec((1, h), lambda i: (0, 0)),          # b2
            pl.BlockSpec((c_pad, h), lambda i: (0, 0)),      # W3^T (resident)
            pl.BlockSpec((c_pad, 1), lambda i: (0, 0)),      # b3^T
        ],
        out_specs=pl.BlockSpec((c_pad, tm_eff), lambda i: (0, i)),
        compiler_params=pltpu.CompilerParams(
            dimension_semantics=("parallel",)),
        cost_estimate=pl.CostEstimate(
            flops=flops,
            transcendentals=transcendentals,
            bytes_accessed=bytes_accessed),
    )(x, w1b, b1f, w2b, b2f, w3tb, b3tf)

    # Cheap wrapper pass: drop padded class rows, transpose back to (tokens, classes).
    # TODO(synk): CrossEntropyLoss labels path not implemented (inference only).
    return logits_t[:num_classes, :].T, None


def init_params(key, vec_dim, num_classes, hidden_dim=128):
    """Deterministic synthetic parameters (shapes match the nn.Linear layers)."""
    ks = jax.random.split(key, 6)

    def lin(kw, kb, fan_in, fan_out):
        bound = 1.0 / jnp.sqrt(fan_in)
        w = jax.random.uniform(kw, (fan_in, fan_out), jnp.float32, -bound, bound)
        b = jax.random.uniform(kb, (1, fan_out), jnp.float32, -bound, bound)
        return w, b

    w1, b1 = lin(ks[0], ks[1], vec_dim, hidden_dim)
    w2, b2 = lin(ks[2], ks[3], hidden_dim, hidden_dim)
    w3, b3 = lin(ks[4], ks[5], hidden_dim, num_classes)
    return (w1, b1, w2, b2, w3, b3)


def _reference(x, params):
    w1, b1, w2, b2, w3, b3 = params
    h1 = jnp.tanh(x @ w1 + b1)
    h2 = jnp.tanh(h1 @ w2 + b2)
    return h2 @ w3 + b3


if __name__ == "__main__":
    VEC_DIM, NUM_CLASSES, HIDDEN = 32, 8, 128

    key = jax.random.PRNGKey(0)
    k_x, k_x2, k_p = jax.random.split(key, 3)
    params = init_params(k_p, VEC_DIM, NUM_CLASSES, HIDDEN)
    prepared = prepare_params(params)          # one-time weight cast / transpose

    # Small case (batch=2, seq=8 flattened to 16 token rows): single-tile path.
    x = jax.random.normal(k_x, (16, VEC_DIM), jnp.float32)
    logits, loss = nernn_forward(x, prepared, NUM_CLASSES)
    logits = jax.block_until_ready(logits)
    ref = _reference(x, params)
    assert logits.shape == (16, NUM_CLASSES)
    assert loss is None
    # bf16 MXU operands -> looser tolerance vs the pure-f32 reference.
    assert jnp.allclose(logits, ref, atol=5e-2, rtol=5e-2)

    # Multi-tile path with a partial boundary block: grid = cdiv(300, 128) = 3.
    x2 = jax.random.normal(k_x2, (300, VEC_DIM), jnp.float32)
    logits2, _ = nernn_forward(x2, prepared, NUM_CLASSES, tm=128)
    logits2 = jax.block_until_ready(logits2)
    ref2 = _reference(x2, params)
    assert logits2.shape == (300, NUM_CLASSES)
    assert jnp.allclose(logits2, ref2, atol=5e-2, rtol=5e-2)

    print("KERNEL_OK")
</pallas_src>

<mosaic_0001>
module attributes {stable_mosaic.version = 11 : i64} {
  func.func @_nernn_kernel(%arg0: i32, %arg1: memref<16x32xf32, #tpu.memory_space<vmem>>, %arg2: memref<32x128xbf16, #tpu.memory_space<vmem>>, %arg3: memref<1x128xf32, #tpu.memory_space<vmem>>, %arg4: memref<128x128xbf16, #tpu.memory_space<vmem>>, %arg5: memref<1x128xf32, #tpu.memory_space<vmem>>, %arg6: memref<8x128xbf16, #tpu.memory_space<vmem>>, %arg7: memref<8x1xf32, #tpu.memory_space<vmem>>, %arg8: memref<8x16xf32, #tpu.memory_space<vmem>>) attributes {dimension_semantics = [#tpu.dimension_semantics<parallel>], iteration_bounds = array<i64: 1>, scalar_prefetch = 0 : i64, scratch_operands = 0 : i64, tpu.core_type = #tpu.core_type<tc>, window_params = [{transform_indices = @transform_0, window_bounds = array<i64: 16, 32>}, {pipeline_mode = #tpu.pipeline_mode<synchronous>, transform_indices = @transform_1, window_bounds = array<i64: 32, 128>}, {pipeline_mode = #tpu.pipeline_mode<synchronous>, transform_indices = @transform_2, window_bounds = array<i64: 1, 128>}, {pipeline_mode = #tpu.pipeline_mode<synchronous>, transform_indices = @transform_3, window_bounds = array<i64: 128, 128>}, {pipeline_mode = #tpu.pipeline_mode<synchronous>, transform_indices = @transform_4, window_bounds = array<i64: 1, 128>}, {pipeline_mode = #tpu.pipeline_mode<synchronous>, transform_indices = @transform_5, window_bounds = array<i64: 8, 128>}, {pipeline_mode = #tpu.pipeline_mode<synchronous>, transform_indices = @transform_6, window_bounds = array<i64: 8, 1>}, {transform_indices = @transform_7, window_bounds = array<i64: 8, 16>}]} {
    %c0 = arith.constant 0 : index
    %c0_0 = arith.constant 0 : index
    %0 = vector.load %arg1[%c0, %c0_0] : memref<16x32xf32, #tpu.memory_space<vmem>>, vector<16x32xf32>
    %1 = arith.truncf %0 : vector<16x32xf32> to vector<16x32xbf16>
    %c0_1 = arith.constant 0 : index
    %c0_2 = arith.constant 0 : index
    %2 = vector.load %arg2[%c0_1, %c0_2] : memref<32x128xbf16, #tpu.memory_space<vmem>>, vector<32x128xbf16>
    %cst = arith.constant dense<0.000000e+00> : vector<16x128xf32>
    %3 = tpu.matmul %1, %2, %cst {dimension_numbers = #tpu.dot_dimension_numbers<[1], [0], [0], [1], [0, 0, 1, 1], [], []>} : vector<16x32xbf16>, vector<32x128xbf16>, vector<16x128xf32> -> vector<16x128xf32>
    %c0_3 = arith.constant 0 : index
    %c0_4 = arith.constant 0 : index
    %4 = vector.load %arg3[%c0_3, %c0_4] : memref<1x128xf32, #tpu.memory_space<vmem>>, vector<1x128xf32>
    %5 = vector.broadcast %4 : vector<1x128xf32> to vector<16x128xf32>
    %6 = arith.addf %3, %5 : vector<16x128xf32>
    %7 = math.tanh %6 : vector<16x128xf32>
    %8 = arith.truncf %7 : vector<16x128xf32> to vector<16x128xbf16>
    %c0_5 = arith.constant 0 : index
    %c0_6 = arith.constant 0 : index
    %9 = vector.load %arg4[%c0_5, %c0_6] : memref<128x128xbf16, #tpu.memory_space<vmem>>, vector<128x128xbf16>
    %cst_7 = arith.constant dense<0.000000e+00> : vector<16x128xf32>
    %10 = tpu.matmul %8, %9, %cst_7 {dimension_numbers = #tpu.dot_dimension_numbers<[1], [0], [0], [1], [0, 0, 1, 1], [], []>} : vector<16x128xbf16>, vector<128x128xbf16>, vector<16x128xf32> -> vector<16x128xf32>
    %c0_8 = arith.constant 0 : index
    %c0_9 = arith.constant 0 : index
    %11 = vector.load %arg5[%c0_8, %c0_9] : memref<1x128xf32, #tpu.memory_space<vmem>>, vector<1x128xf32>
    %12 = vector.broadcast %11 : vector<1x128xf32> to vector<16x128xf32>
    %13 = arith.addf %10, %12 : vector<16x128xf32>
    %14 = math.tanh %13 : vector<16x128xf32>
    %c0_10 = arith.constant 0 : index
    %c0_11 = arith.constant 0 : index
    %15 = vector.load %arg6[%c0_10, %c0_11] : memref<8x128xbf16, #tpu.memory_space<vmem>>, vector<8x128xbf16>
    %16 = arith.truncf %14 : vector<16x128xf32> to vector<16x128xbf16>
    %cst_12 = arith.constant dense<0.000000e+00> : vector<8x16xf32>
    %17 = tpu.matmul %15, %16, %cst_12 {dimension_numbers = #tpu.dot_dimension_numbers<[1], [1], [0], [0], [0, 0, 1, 0], [], []>} : vector<8x128xbf16>, vector<16x128xbf16>, vector<8x16xf32> -> vector<8x16xf32>
    %c0_13 = arith.constant 0 : index
    %c0_14 = arith.constant 0 : index
    %18 = vector.load %arg7[%c0_13, %c0_14] : memref<8x1xf32, #tpu.memory_space<vmem>>, vector<8x1xf32>
    %19 = vector.broadcast %18 : vector<8x1xf32> to vector<8x16xf32>
    %20 = arith.addf %17, %19 : vector<8x16xf32>
    %c0_15 = arith.constant 0 : index
    %c0_16 = arith.constant 0 : index
    %21 = vector.load %arg8[%c0_15, %c0_16] : memref<8x16xf32, #tpu.memory_space<vmem>>, vector<8x16xf32>
    tpu.vector_store %arg8[%c0_15, %c0_16], %20 {strides = array<i32>} : memref<8x16xf32, #tpu.memory_space<vmem>>, vector<8x16xf32>,
    return
  }
  func.func @transform_0(%arg0: i32) -> (i32, i32) {
    %c0_i32 = arith.constant 0 : i32
    %c0_i32_0 = arith.constant 0 : i32
    return %arg0, %c0_i32 : i32, i32
  }
  func.func @transform_1(%arg0: i32) -> (i32, i32) {
    %c0_i32 = arith.constant 0 : i32
    %c0_i32_0 = arith.constant 0 : i32
    %c0_i32_1 = arith.constant 0 : i32
    return %c0_i32, %c0_i32_0 : i32, i32
  }
  func.func @transform_2(%arg0: i32) -> (i32, i32) {
    %c0_i32 = arith.constant 0 : i32
    %c0_i32_0 = arith.constant 0 : i32
    %c0_i32_1 = arith.constant 0 : i32
    return %c0_i32, %c0_i32_0 : i32, i32
  }
  func.func @transform_3(%arg0: i32) -> (i32, i32) {
    %c0_i32 = arith.constant 0 : i32
    %c0_i32_0 = arith.constant 0 : i32
    %c0_i32_1 = arith.constant 0 : i32
    return %c0_i32, %c0_i32_0 : i32, i32
  }
  func.func @transform_4(%arg0: i32) -> (i32, i32) {
    %c0_i32 = arith.constant 0 : i32
    %c0_i32_0 = arith.constant 0 : i32
    %c0_i32_1 = arith.constant 0 : i32
    return %c0_i32, %c0_i32_0 : i32, i32
  }
  func.func @transform_5(%arg0: i32) -> (i32, i32) {
    %c0_i32 = arith.constant 0 : i32
    %c0_i32_0 = arith.constant 0 : i32
    %c0_i32_1 = arith.constant 0 : i32
    return %c0_i32, %c0_i32_0 : i32, i32
  }
  func.func @transform_6(%arg0: i32) -> (i32, i32) {
    %c0_i32 = arith.constant 0 : i32
    %c0_i32_0 = arith.constant 0 : i32
    %c0_i32_1 = arith.constant 0 : i32
    return %c0_i32, %c0_i32_0 : i32, i32
  }
  func.func @transform_7(%arg0: i32) -> (i32, i32) {
    %c0_i32 = arith.constant 0 : i32
    %c0_i32_0 = arith.constant 0 : i32
    return %c0_i32, %arg0 : i32, i32
  }
}

</mosaic_0001>

<llo_original>
// kernel: tpu_custom_call.1
$region0: #{tpu_custom_call.1}
  #allocation0 [shape = 'u32[]', space=smem, size = 0x4, offset = 0x4, fixed_abs, tag = 'smem constant byte address 0x4 - core index']
  #allocation1 [shape = 'u32[144,128]{1,0:T(1,128)}', space=vmem, size = 0x12000, scoped, tag = 'internal scratch']
  %s0 = inlined_call_operand.hbm [shape: f32[16,32], index: 0, kind: input, shape index: {}]
  %s1 = inlined_call_operand.hbm [shape: bf16[32,128], index: 1, kind: input, shape index: {}]
  %s2 = inlined_call_operand.vmem [shape: f32[1,128], index: 2, kind: input, shape index: {}]
  %s3 = inlined_call_operand.hbm [shape: bf16[128,128], index: 3, kind: input, shape index: {}]
  %s4 = inlined_call_operand.vmem [shape: f32[1,128], index: 4, kind: input, shape index: {}]
  %s5 = inlined_call_operand.vmem [shape: bf16[8,128], index: 5, kind: input, shape index: {}]
  %s6 = inlined_call_operand.vmem [shape: f32[8,1], index: 6, kind: input, shape index: {}]
  %s7 = inlined_call_operand.hbm [shape: f32[8,16], index: 7, kind: output, shape index: {}]
  %s8 = sld [smem:[#allocation0]]
  $region50: #{tpu_custom_call.1} parent=0
    _
  %s10 = ssub.s32 1, %s8
  %s11 = scalar_select 0, %s10, %s8
  $region1: #{tpu_custom_call.1} parent=0
    #allocation2 [shape = 'u8[8192]{0}', space=vmem, size = 0x2000, scoped, tag = 'input window, operand 0, single buffered']
    #allocation3 [shape = 's32[1]{0}', space=sflag, size = 0x4, scoped, tag = 'scoped memory for tpu_custom_call.1']
    #allocation4 [shape = 's32[1]{0}', space=sflag, size = 0x4, scoped, tag = 'scoped memory for tpu_custom_call.1']
    #allocation5 [shape = 'u8[8192]{0}', space=vmem, size = 0x2000, scoped, tag = 'input window, operand 1, single buffered']
    #allocation6 [shape = 's32[1]{0}', space=sflag, size = 0x4, scoped, tag = 'scoped memory for tpu_custom_call.1']
    #allocation7 [shape = 'u8[32768]{0}', space=vmem, size = 0x8000, scoped, tag = 'input window, operand 3, single buffered']
    #allocation8 [shape = 'u8[4096]{0}', space=vmem, size = 0x1000, scoped, tag = 'output window, operand 0, single buffered']
    %12 = vsyncpa [#allocation3], 0
    %13 = vsyncpa [#allocation6], 0
    %14 = vsyncpa [#allocation4], 0
    // Predicated region
    $region2: #{tpu_custom_call.1} parent=1 // pred_check
      _
    $region3: #{tpu_custom_call.1} parent=1 // pred_check_branch
      %16 = sbr.rel (0) target = $region5
    $region4: #{tpu_custom_call.1} parent=1 // pred_region
      %s18 = ssub.s32 256, 256
      %19 = vsyncadd [#allocation3], %s18
      %s20 = sshll.u32 [#allocation2], 4
      %s21 = int_to_ptr.vmem [resolvable:$true] %s20
      %26 = dma.hbm_to_vmem [thread:$0]  %s0, 256, %s21, [#allocation3], 128, 128, 8
    $region5: #{tpu_custom_call.1} parent=1 // pred_fallthru
      _
    // Predicated region
    $region6: #{tpu_custom_call.1} parent=1 // pred_check
      _
    $region7: #{tpu_custom_call.1} parent=1 // pred_check_branch
      %28 = sbr.rel (0) target = $region9
    $region8: #{tpu_custom_call.1} parent=1 // pred_region
      %s30 = ssub.s32 256, 256
      %31 = vsyncadd [#allocation6], %s30
      %s32 = sshll.u32 [#allocation5], 4
      %s33 = int_to_ptr.vmem [resolvable:$true] %s32
      %38 = dma.hbm_to_vmem [thread:$0]  %s1, 256, %s33, [#allocation6], 64, 64, 4
    $region9: #{tpu_custom_call.1} parent=1 // pred_fallthru
      _
    // Predicated region
    $region10: #{tpu_custom_call.1} parent=1 // pred_check
      _
    $region11: #{tpu_custom_call.1} parent=1 // pred_check_branch
      %40 = sbr.rel (0) target = $region13
    $region12: #{tpu_custom_call.1} parent=1 // pred_region
      _
    $region13: #{tpu_custom_call.1} parent=1 // pred_fallthru
      _
    // Predicated region
    $region14: #{tpu_custom_call.1} parent=1 // pred_check
      _
    $region15: #{tpu_custom_call.1} parent=1 // pred_check_branch
      %42 = sbr.rel (0) target = $region17
    $region16: #{tpu_custom_call.1} parent=1 // pred_region
      %s44 = ssub.s32 1024, 1024
      %45 = vsyncadd [#allocation6], %s44
      %s46 = sshll.u32 [#allocation7], 4
      %s47 = int_to_ptr.vmem [resolvable:$true] %s46
      %52 = dma.hbm_to_vmem [thread:$0]  %s3, 1024, %s47, [#allocation6], 64, 64, 4
    $region17: #{tpu_custom_call.1} parent=1 // pred_fallthru
      _
    // Predicated region
    $region18: #{tpu_custom_call.1} parent=1 // pred_check
      _
    $region19: #{tpu_custom_call.1} parent=1 // pred_check_branch
      %54 = sbr.rel (0) target = $region21
    $region20: #{tpu_custom_call.1} parent=1 // pred_region
      _
    $region21: #{tpu_custom_call.1} parent=1 // pred_fallthru
      _
    // Predicated region
    $region22: #{tpu_custom_call.1} parent=1 // pred_check
      _
    $region23: #{tpu_custom_call.1} parent=1 // pred_check_branch
      %56 = sbr.rel (0) target = $region25
    $region24: #{tpu_custom_call.1} parent=1 // pred_region
      _
    $region25: #{tpu_custom_call.1} parent=1 // pred_fallthru
      _
    // Predicated region
    $region26: #{tpu_custom_call.1} parent=1 // pred_check
      _
    $region27: #{tpu_custom_call.1} parent=1 // pred_check_branch
      %58 = sbr.rel (0) target = $region29
    $region28: #{tpu_custom_call.1} parent=1 // pred_region
      _
    $region29: #{tpu_custom_call.1} parent=1 // pred_fallthru
      _
    // Predicated region
    $region30: #{tpu_custom_call.1} parent=1 // pred_check
      _
    $region31: #{tpu_custom_call.1} parent=1 // pred_check_branch
      %60 = sbr.rel (0) target = $region33
    $region32: #{tpu_custom_call.1} parent=1 // pred_region
      %61 = dma.done [#allocation3], 256
    $region33: #{tpu_custom_call.1} parent=1 // pred_fallthru
      _
    // Predicated region
    $region34: #{tpu_custom_call.1} parent=1 // pred_check
      _
    $region35: #{tpu_custom_call.1} parent=1 // pred_check_branch
      %63 = sbr.rel (0) target = $region37
    $region36: #{tpu_custom_call.1} parent=1 // pred_region
      %64 = dma.done [#allocation6], 256
    $region37: #{tpu_custom_call.1} parent=1 // pred_fallthru
      _
    // Predicated region
    $region38: #{tpu_custom_call.1} parent=1 // pred_check
      _
    $region39: #{tpu_custom_call.1} parent=1 // pred_check_branch
      %66 = sbr.rel (0) target = $region41
    $region40: #{tpu_custom_call.1} parent=1 // pred_region
      %67 = dma.done [#allocation6], 1024
    $region41: #{tpu_custom_call.1} parent=1 // pred_fallthru
      _
    %v69 = vld [vmem:[#allocation2] sm:$0xff]
    %v70 = vld [vmem:[#allocation2 + $0x8] sm:$0xff]
    %v71 = vpack.c.bf16 %v70, %v69
    %v72 = vld [vmem:[#allocation5] sm:$0xf]
    %v73 = vld [vmem:[#allocation5 + $0x4] sm:$0xf]
    %v74 = vld [vmem:[#allocation5 + $0x8] sm:$0xf]
    %v75 = vld [vmem:[#allocation5 + $0xc] sm:$0xf]
    %v76 = vld [vmem:[%s2] sm:$0x1]
    %v78 = vlaneseq
    %v79 = vshrl.u32 %v78, 7
    %v80 = vsub.s32 0, %v79
    %v81 = vrot.slane %v76, %v80
    %v87 = vunpack.c.l.b16 %v72
    %v88 = vunpack.c.l.b16 %v73
    %v89 = vunpack.c.l.b16 %v74
    %v90 = vunpack.c.l.b16 %v75
    %v91 = vpack.c.b16 %v88, %v87
    %v92 = vpack.c.b16 %v90, %v89
    %vm95 = vcmask 261120
    %v97 = vsel %vm95, %v71, 0
    %99 = vmatprep.subr.bf16.mxu0 0
    %100 = vmatpush1.bf16.msra.mxu0 %v91
    %101 = vmatprep.subr.bf16.mxu0 0
    %102 = vmatpush1.bf16.msra.mxu0 %v92
    %103 = vmatprep.subr.bf16.mxu0 0
    %104 = vmatpush1.bf16.msra.mxu0 0
    %105 = vmatprep.subr.bf16.mxu0 0
    %106 = vmatpush1.bf16.msra.mxu0 0
    %107 = vmatprep.subr.bf16.mxu0 0
    %108 = vmatpush1.bf16.msra.mxu0 0
    %109 = vmatprep.subr.bf16.mxu0 0
    %110 = vmatpush1.bf16.msra.mxu0 0
    %111 = vmatprep.subr.bf16.mxu0 0
    %112 = vmatpush1.bf16.msra.mxu0 0
    %113 = vmatprep.subr.bf16.mxu0 0
    %114 = vmatpush1.bf16.msra.mxu0 0
    %115 = vmatprep.subr.bf16.mxu0 0
    %116 = vmatpush1.bf16.msra.mxu0 0
    %117 = vmatprep.subr.bf16.mxu0 0
    %118 = vmatpush1.bf16.msra.mxu0 0
    %119 = vmatprep.subr.bf16.mxu0 0
    %120 = vmatpush1.bf16.msra.mxu0 0
    %121 = vmatprep.subr.bf16.mxu0 0
    %122 = vmatpush1.bf16.msra.mxu0 0
    %123 = vmatprep.subr.bf16.mxu0 0
    %124 = vmatpush1.bf16.msra.mxu0 0
    %125 = vmatprep.subr.bf16.mxu0 0
    %126 = vmatpush1.bf16.msra.mxu0 0
    %127 = vmatprep.subr.bf16.mxu0 0
    %128 = vmatpush1.bf16.msra.mxu0 0
    %129 = vmatprep.subr.bf16.mxu0 0
    %130 = vmatpush1.bf16.msra.mxu0 0
    %131 = vmatprep.mubr.bf16.mxu0 0
    %132 = vmatmul.mubr.bf16.gmra.mrb[0].mxu0 %v97
    %v133 = vpop.f32.mrb[0].mxu0
    %v134 = vadd.f32 %v81, %v133
    %v135 = vpop.f32.mrb[0].mxu0
    %v136 = vpop.f32.mrb[0].mxu0
    %v137 = vadd.f32 %v81, %v136
    %v138 = vpop.f32.mrb[0].mxu0
    %139 = vdwg.mxu0
    %v140 = vtanh.pop %v134
    %v141 = vtanh.pop %v137
    %v142 = vpack.c.bf16 %v141, %v140
    %v143 = vld [vmem:[#allocation7] sm:$0xf]
    %v144 = vld [vmem:[#allocation7 + $0x4] sm:$0xf]
    %v145 = vld [vmem:[#allocation7 + $0x8] sm:$0xf]
    %v146 = vld [vmem:[#allocation7 + $0xc] sm:$0xf]
    %v147 = vld [vmem:[#allocation7 + $0x10] sm:$0xf]
    %v148 = vld [vmem:[#allocation7 + $0x14] sm:$0xf]
    %v149 = vld [vmem:[#allocation7 + $0x18] sm:$0xf]
    %v150 = vld [vmem:[#allocation7 + $0x1c] sm:$0xf]
    %v151 = vld [vmem:[#allocation7 + $0x20] sm:$0xf]
    %v152 = vld [vmem:[#allocation7 + $0x24] sm:$0xf]
    %v153 = vld [vmem:[#allocation7 + $0x28] sm:$0xf]
    %v154 = vld [vmem:[#allocation7 + $0x2c] sm:$0xf]
    %v155 = vld [vmem:[#allocation7 + $0x30] sm:$0xf]
    %v156 = vld [vmem:[#allocation7 + $0x34] sm:$0xf]
    %v157 = vld [vmem:[#allocation7 + $0x38] sm:$0xf]
    %v158 = vld [vmem:[#allocation7 + $0x3c] sm:$0xf]
    %v159 = vld [vmem:[%s4] sm:$0x1]
    %v161 = vlaneseq
    %v162 = vshrl.u32 %v161, 7
    %v163 = vsub.s32 0, %v162
    %v164 = vrot.slane %v159, %v163
    %v182 = vunpack.c.l.b16 %v143
    %v183 = vunpack.c.l.b16 %v144
    %v184 = vunpack.c.l.b16 %v145
    %v185 = vunpack.c.l.b16 %v146
    %v186 = vunpack.c.l.b16 %v147
    %v187 = vunpack.c.l.b16 %v148
    %v188 = vunpack.c.l.b16 %v149
    %v189 = vunpack.c.l.b16 %v150
    %v190 = vunpack.c.l.b16 %v151
    %v191 = vunpack.c.l.b16 %v152
    %v192 = vunpack.c.l.b16 %v153
    %v193 = vunpack.c.l.b16 %v154
    %v194 = vunpack.c.l.b16 %v155
    %v195 = vunpack.c.l.b16 %v156
    %v196 = vunpack.c.l.b16 %v157
    %v197 = vunpack.c.l.b16 %v158
    %v198 = vpack.c.b16 %v183, %v182
    %v199 = vpack.c.b16 %v185, %v184
    %v200 = vpack.c.b16 %v187, %v186
    %v201 = vpack.c.b16 %v189, %v188
    %v202 = vpack.c.b16 %v191, %v190
    %v203 = vpack.c.b16 %v193, %v192
    %v204 = vpack.c.b16 %v195, %v194
    %v205 = vpack.c.b16 %v197, %v196
    %214 = vmatprep.subr.bf16.mxu0 0
    %215 = vmatpush1.bf16.msra.mxu0 %v198
    %216 = vmatprep.subr.bf16.mxu0 0
    %217 = vmatpush1.bf16.msra.mxu0 %v199
    %218 = vmatprep.subr.bf16.mxu0 0
    %219 = vmatpush1.bf16.msra.mxu0 %v200
    %220 = vmatprep.subr.bf16.mxu0 0
    %221 = vmatpush1.bf16.msra.mxu0 %v201
    %222 = vmatprep.subr.bf16.mxu0 0
    %223 = vmatpush1.bf16.msra.mxu0 %v202
    %224 = vmatprep.subr.bf16.mxu0 0
    %225 = vmatpush1.bf16.msra.mxu0 %v203
    %226 = vmatprep.subr.bf16.mxu0 0
    %227 = vmatpush1.bf16.msra.mxu0 %v204
    %228 = vmatprep.subr.bf16.mxu0 0
    %229 = vmatpush1.bf16.msra.mxu0 %v205
    %230 = vmatprep.subr.bf16.mxu0 0
    %231 = vmatpush1.bf16.msra.mxu0 0
    %232 = vmatprep.subr.bf16.mxu0 0
    %233 = vmatpush1.bf16.msra.mxu0 0
    %234 = vmatprep.subr.bf16.mxu0 0
    %235 = vmatpush1.bf16.msra.mxu0 0
    %236 = vmatprep.subr.bf16.mxu0 0
    %237 = vmatpush1.bf16.msra.mxu0 0
    %238 = vmatprep.subr.bf16.mxu0 0
    %239 = vmatpush1.bf16.msra.mxu0 0
    %240 = vmatprep.subr.bf16.mxu0 0
    %241 = vmatpush1.bf16.msra.mxu0 0
    %242 = vmatprep.subr.bf16.mxu0 0
    %243 = vmatpush1.bf16.msra.mxu0 0
    %244 = vmatprep.subr.bf16.mxu0 0
    %245 = vmatpush1.bf16.msra.mxu0 0
    %246 = vmatprep.mubr.bf16.mxu0 0
    %247 = vmatmul.mubr.bf16.gmra.mrb[0].mxu0 %v142
    %v248 = vpop.f32.mrb[0].mxu0
    %v249 = vadd.f32 %v164, %v248
    %v250 = vpop.f32.mrb[0].mxu0
    %v251 = vpop.f32.mrb[0].mxu0
    %v252 = vadd.f32 %v164, %v251
    %v253 = vpop.f32.mrb[0].mxu0
    %254 = vdwg.mxu0
    %v255 = vtanh.pop %v249
    %v256 = vtanh.pop %v252
    %v257 = vld [vmem:[%s5] sm:$0xf]
    %v258 = vpack.c.bf16 %v256, %v255
    %v259 = vld [vmem:[%s6] sm:$0xff]
    %261 = vset.pattern.permute.xlu0 0
    %262 = vperm.xlu0 %261, %v259
    %v263 = vpop.permute.xlu0 %262
    %265 = vmatprep.subr.bf16.mxu0 0
    %266 = vmatpush1.bf16.xpose.msra.mxu0 %v258
    %267 = vmatprep.subr.bf16.mxu0 0
    %268 = vmatpush1.bf16.xpose.msra.mxu0 0
    %269 = vmatprep.subr.bf16.mxu0 0
    %270 = vmatpush1.bf16.xpose.msra.mxu0 0
    %271 = vmatprep.subr.bf16.mxu0 0
    %272 = vmatpush1.bf16.xpose.msra.mxu0 0
    %273 = vmatprep.subr.bf16.mxu0 0
    %274 = vmatpush1.bf16.xpose.msra.mxu0 0
    %275 = vmatprep.subr.bf16.mxu0 0
    %276 = vmatpush1.bf16.xpose.msra.mxu0 0
    %277 = vmatprep.subr.bf16.mxu0 0
    %278 = vmatpush1.bf16.xpose.msra.mxu0 0
    %279 = vmatprep.subr.bf16.mxu0 0
    %280 = vmatpush1.bf16.xpose.msra.mxu0 0
    %281 = vmatprep.subr.bf16.mxu0 0
    %282 = vmatpush1.bf16.xpose.msra.mxu0 0
    %283 = vmatprep.subr.bf16.mxu0 0
    %284 = vmatpush1.bf16.xpose.msra.mxu0 0
    %285 = vmatprep.subr.bf16.mxu0 0
    %286 = vmatpush1.bf16.xpose.msra.mxu0 0
    %287 = vmatprep.subr.bf16.mxu0 0
    %288 = vmatpush1.bf16.xpose.msra.mxu0 0
    %289 = vmatprep.subr.bf16.mxu0 0
    %290 = vmatpush1.bf16.xpose.msra.mxu0 0
    %291 = vmatprep.subr.bf16.mxu0 0
    %292 = vmatpush1.bf16.xpose.msra.mxu0 0
    %293 = vmatprep.subr.bf16.mxu0 0
    %294 = vmatpush1.bf16.xpose.msra.mxu0 0
    %295 = vmatprep.subr.bf16.mxu0 0
    %296 = vmatpush1.bf16.xpose.msra.mxu0 0
    %297 = vmatprep.mubr.bf16.mxu0 0
    %298 = vmatmul.mubr.bf16.gmra.mrb[0].mxu0 %v257
    %v299 = vpop.f32.mrb[0].mxu0
    %v300 = vadd.f32 %v263, %v299
    %v301 = vpop.f32.mrb[0].mxu0
    %v302 = vpop.f32.mrb[0].mxu0
    %v303 = vpop.f32.mrb[0].mxu0
    %304 = vdwg.mxu0
    %vm305 = vcmask 130048
    %306 = vst.msk [vmem:[#allocation8] sm:$0xff] %vm305, %v300
    // Predicated region
    $region42: #{tpu_custom_call.1} parent=1 // pred_check
      _
    $region43: #{tpu_custom_call.1} parent=1 // pred_check_branch
      %308 = sbr.rel (0) target = $region45
    $region44: #{tpu_custom_call.1} parent=1 // pred_region
      %s310 = ssub.s32 128, 128
      %311 = vsyncadd [#allocation4], %s310
      %s313 = sshll.u32 [#allocation8], 4
      %s314 = int_to_ptr.vmem [resolvable:$true] %s313
      %316 = dma.vmem_to_hbm [thread:$0]  %s314, 128, %s7, [#allocation4]
    $region45: #{tpu_custom_call.1} parent=1 // pred_fallthru
      _
    // Predicated region
    $region46: #{tpu_custom_call.1} parent=1 // pred_check
      _
    $region47: #{tpu_custom_call.1} parent=1 // pred_check_branch
      %318 = sbr.rel (0) target = $region49
    $region48: #{tpu_custom_call.1} parent=1 // pred_region
      %319 = dma.done [#allocation4], 128
    $region49: #{tpu_custom_call.1} parent=1 // pred_fallthru
      _
    %320 = vsyncpa [#allocation3], 1
    %321 = vsyncpa [#allocation6], 1
    %322 = vsyncpa [#allocation4], 1

</llo_original>
